<compile_context>
chip_gen: v5e
topology: v5e:2x2
jax: 0.10.0
libtpu: 0.0.40
codegen_flags: <defaults>
</compile_context>

<pallas_src>
import functools

import jax
import jax.numpy as jnp
import numpy as np
from jax.experimental import pallas as pl
from jax.experimental.pallas import tpu as pltpu


def _round_up(x, m):
    return (x + m - 1) // m * m


def _sublane_pack(itemsize):
    # Rows per VMEM tile for a given element size (8 for f32, 16 for bf16, ...).
    return 8 * max(1, 4 // int(itemsize))


def _padded_block_bytes(rows, cols, itemsize):
    return _round_up(rows, _sublane_pack(itemsize)) * _round_up(cols, 128) * int(itemsize)


def _yolo_decode_kernel(x_ref, off_ref, scale_ref, o_ref, *, nA, C, R):
    """Decode one (batch, spatial-tile) block, channel-major layout.

    x_ref     : VMEM (1, nA, C, tS)   raw predictions (NCHW view), spatial on lanes
    off_ref   : VMEM (R, tS)    f32   additive offsets for decode rows (gx, gy, 0...)
    scale_ref : VMEM (nA, R, 1) f32   multiplicative scales for decode rows
    o_ref     : VMEM (1, nA, C, tS)   decoded predictions, same channel-major layout
    """
    # (R, 1) row masks; jnp.where broadcasts them along lanes (no (C, S) iota tiles).
    ci = jax.lax.broadcasted_iota(jnp.int32, (R, 1), 0)
    use_sig = (ci < 2) | (ci == 4)            # x, y, objectness -> sigmoid
    use_exp = (ci == 2) | (ci == 3)           # w, h             -> exp
    off = off_ref[...]                        # (R, tS) f32, loop invariant

    for a in range(nA):                       # static unroll; nA is small (3)
        xf = x_ref[0, a, :R].astype(jnp.float32)          # decode sub-tile only
        sig = jax.nn.sigmoid(xf)                          # EUP
        ex = jnp.exp(jnp.where(use_exp, xf, 0.0))         # EUP (guarded vs overflow)
        val = jnp.where(use_sig, sig, jnp.where(use_exp, ex, xf))
        dec = (val + off) * scale_ref[a]                  # (R,tS) * (R,1) lane-broadcast
        o_ref[0, a, :R] = dec.astype(o_ref.dtype)

    if C > R:
        # Class rows >= 8: pure lane-dense copy, no f32 widen when dtypes match.
        # TODO(synk): class logits stay raw, exactly like this torch module; some
        # YOLOv3 variants apply sigmoid to class scores as well.
        o_ref[0, :, R:] = x_ref[0, :, R:].astype(o_ref.dtype)


def yolo_layer_forward(p_nchw, anchors, nC, img_size, *, block_s=None, out_dtype=None):
    """p_nchw: (bs, nA*(nC+5), nG, nG) -> (bs, nA*nG*nG, 5+nC) like the torch module."""
    bs = int(p_nchw.shape[0])
    nG = int(p_nchw.shape[-1])
    nA = int(anchors.shape[0])
    C = nC + 5
    S = nG * nG
    assert p_nchw.shape[1] == nA * C and p_nchw.shape[2] == nG

    stride = float(img_size) / float(nG)
    R = min(8, C)                                  # decode rows (sublane-aligned)
    out_dtype = p_nchw.dtype if out_dtype is None else jnp.dtype(out_dtype)

    # Spatial tile: multiple of 128 (unmasked lane-dense vectors) or the full extent.
    if block_s is None:
        block_s = S if S <= 1024 else 1024         # TODO(synk): sweep 512-2048 per chip
    block_s = int(block_s)
    assert block_s == S or block_s % 128 == 0, \
        "block_s must be the full spatial extent or a multiple of 128"
    num_s = pl.cdiv(S, block_s)

    # Free view of NCHW: (bs, nA, C, nG*nG) -- pure reshape, no data movement.
    x = p_nchw.reshape(bs, nA, C, S)

    # Additive offsets for the decode rows: row0 = grid_x, row1 = grid_y, else 0.
    flat = np.arange(S)
    off_np = np.zeros((R, S), np.float32)
    off_np[0] = (flat % nG).astype(np.float32)
    off_np[1] = (flat // nG).astype(np.float32)
    offset = jnp.asarray(off_np)

    # Multiplicative scales for the decode rows, per anchor:
    #   [stride, stride, anchor_vec_w*stride, anchor_vec_h*stride, 1, ...]
    anchor_vec = jnp.asarray(anchors, jnp.float32) / stride
    scale = jnp.ones((nA, R), jnp.float32)
    scale = scale.at[:, 0].set(stride).at[:, 1].set(stride)
    scale = scale.at[:, 2].set(anchor_vec[:, 0] * stride)
    scale = scale.at[:, 3].set(anchor_vec[:, 1] * stride)
    scale = scale[..., None]                                   # (nA, R, 1)

    # VMEM budget: double-buffered in/out blocks + resident constants + headroom,
    # accounting for (sublane, lane) padding; capped v7x-safe (64 MiB physical).
    in_blk = nA * _padded_block_bytes(C, block_s, p_nchw.dtype.itemsize)
    out_blk = nA * _padded_block_bytes(C, block_s, out_dtype.itemsize)
    const = _padded_block_bytes(R, block_s, 4) + nA * _padded_block_bytes(R, 1, 4)
    need = 2 * (in_blk + out_blk + const) + (2 << 20)
    vmem_limit = int(min(max(need, 16 << 20), 40 << 20))

    kernel = functools.partial(_yolo_decode_kernel, nA=nA, C=C, R=R)

    out = pl.pallas_call(
        kernel,
        out_shape=jax.ShapeDtypeStruct((bs, nA, C, S), out_dtype),
        grid_spec=pltpu.PrefetchScalarGridSpec(
            num_scalar_prefetch=0,
            grid=(bs, num_s),
            in_specs=[
                pl.BlockSpec((1, nA, C, block_s), lambda b, s: (b, 0, 0, s)),
                pl.BlockSpec((R, block_s), lambda b, s: (0, s)),
                pl.BlockSpec((nA, R, 1), lambda b, s: (0, 0, 0)),   # resident constant
            ],
            out_specs=pl.BlockSpec((1, nA, C, block_s), lambda b, s: (b, 0, 0, s)),
        ),
        compiler_params=pltpu.CompilerParams(
            dimension_semantics=("parallel", "parallel"),
            vmem_limit_bytes=vmem_limit),
    )(x, offset, scale)

    # Channel-last layout the torch module returns; done by XLA on the lane-dense
    # kernel output (mirrors torch's own .permute(0,1,3,4,2).contiguous()).
    out = out.reshape(bs, nA, C, nG, nG).transpose(0, 1, 3, 4, 2)
    return out.reshape(bs, nA * S, C)


def yolo_layer_reference(p_nchw, anchors, nC, img_size):
    """Pure-JAX reference mirroring the PyTorch forward (inference branch)."""
    bs = p_nchw.shape[0]
    nG = p_nchw.shape[-1]
    nA = anchors.shape[0]
    C = nC + 5
    stride = float(img_size) / float(nG)

    p = p_nchw.astype(jnp.float32).reshape(bs, nA, C, nG, nG).transpose(0, 1, 3, 4, 2)

    grid_x = jnp.tile(jnp.arange(nG, dtype=jnp.float32), (nG, 1)).reshape(1, 1, nG, nG)
    grid_y = jnp.transpose(grid_x, (0, 1, 3, 2))
    grid_xy = jnp.stack((grid_x, grid_y), axis=4)                  # (1,1,nG,nG,2)
    anchor_wh = (anchors.astype(jnp.float32) / stride).reshape(1, nA, 1, 1, 2)

    xy = jax.nn.sigmoid(p[..., 0:2]) + grid_xy
    wh = jnp.exp(p[..., 2:4]) * anchor_wh
    conf = jax.nn.sigmoid(p[..., 4:5])
    box = jnp.concatenate([xy, wh], axis=-1) * stride
    out = jnp.concatenate([box, conf, p[..., 5:]], axis=-1)
    return out.reshape(bs, -1, C)


if __name__ == "__main__":
    bs, nA, nC, nG, img_size = 2, 3, 3, 16, 64          # C = nC + 5 = 8, S = 256
    anchors = jnp.array([[10.0, 13.0], [16.0, 30.0], [33.0, 23.0]], dtype=jnp.float32)

    key = jax.random.PRNGKey(0)
    p = jax.random.normal(key, (bs, nA * (nC + 5), nG, nG), dtype=jnp.float32)

    # f32 path, two spatial tiles (exercises the pipelined spatial grid axis).
    out = jax.block_until_ready(yolo_layer_forward(p, anchors, nC, img_size, block_s=128))
    ref = yolo_layer_reference(p, anchors, nC, img_size)
    np.testing.assert_allclose(np.asarray(out), np.asarray(ref), rtol=1e-5, atol=1e-5)
    assert out.shape == (bs, nA * nG * nG, nC + 5)

    # bf16 input (halves HBM read traffic on this bandwidth-bound decode), f32
    # output so decoded pixel coordinates keep full precision (f32 math inside).
    p_bf16 = p.astype(jnp.bfloat16)
    out_bf = jax.block_until_ready(
        yolo_layer_forward(p_bf16, anchors, nC, img_size, out_dtype=jnp.float32))
    ref_bf = yolo_layer_reference(p_bf16.astype(jnp.float32), anchors, nC, img_size)
    np.testing.assert_allclose(np.asarray(out_bf), np.asarray(ref_bf), rtol=1e-5, atol=1e-5)

    # C > 8 (exercises the class-row pass-through copy) with a non-multiple-of-128
    # spatial extent (nG = 13 -> S = 169, single full-extent spatial tile).
    nC2, nG2, img2 = 11, 13, 416                        # C = 16
    p2 = jax.random.normal(jax.random.PRNGKey(1),
                           (bs, nA * (nC2 + 5), nG2, nG2), dtype=jnp.float32)
    out2 = jax.block_until_ready(yolo_layer_forward(p2, anchors, nC2, img2))
    ref2 = yolo_layer_reference(p2, anchors, nC2, img2)
    np.testing.assert_allclose(np.asarray(out2), np.asarray(ref2), rtol=1e-5, atol=1e-5)

    print("KERNEL_OK")
</pallas_src>

<mosaic_0001>
module attributes {stable_mosaic.version = 11 : i64} {
  func.func @_yolo_decode_kernel(%arg0: i32, %arg1: i32, %arg2: memref<1x3x8x128xf32, #tpu.memory_space<vmem>>, %arg3: memref<8x128xf32, #tpu.memory_space<vmem>>, %arg4: memref<3x8x1xf32, #tpu.memory_space<vmem>>, %arg5: memref<1x3x8x128xf32, #tpu.memory_space<vmem>>) attributes {dimension_semantics = [#tpu.dimension_semantics<parallel>, #tpu.dimension_semantics<parallel>], iteration_bounds = array<i64: 2, 2>, scalar_prefetch = 0 : i64, scratch_operands = 0 : i64, tpu.core_type = #tpu.core_type<tc>, window_params = [{transform_indices = @transform_0, window_bounds = array<i64: 1, 3, 8, 128>}, {transform_indices = @transform_1, window_bounds = array<i64: 8, 128>}, {pipeline_mode = #tpu.pipeline_mode<synchronous>, transform_indices = @transform_2, window_bounds = array<i64: 3, 8, 1>}, {transform_indices = @transform_3, window_bounds = array<i64: 1, 3, 8, 128>}]} {
    %0 = tpu.iota {dimensions = array<i32: 0>} : vector<8x1xi32>
    %c2_i32 = arith.constant 2 : i32
    %1 = vector.broadcast %c2_i32 : i32 to vector<8x1xi32>
    %2 = arith.cmpi slt, %0, %1 : vector<8x1xi32>
    %c4_i32 = arith.constant 4 : i32
    %3 = vector.broadcast %c4_i32 : i32 to vector<8x1xi32>
    %4 = arith.cmpi eq, %0, %3 : vector<8x1xi32>
    %5 = arith.ori %2, %4 : vector<8x1xi1>
    %c2_i32_0 = arith.constant 2 : i32
    %6 = vector.broadcast %c2_i32_0 : i32 to vector<8x1xi32>
    %7 = arith.cmpi eq, %0, %6 : vector<8x1xi32>
    %c3_i32 = arith.constant 3 : i32
    %8 = vector.broadcast %c3_i32 : i32 to vector<8x1xi32>
    %9 = arith.cmpi eq, %0, %8 : vector<8x1xi32>
    %10 = arith.ori %7, %9 : vector<8x1xi1>
    %c0 = arith.constant 0 : index
    %c0_1 = arith.constant 0 : index
    %11 = vector.load %arg3[%c0, %c0_1] : memref<8x128xf32, #tpu.memory_space<vmem>>, vector<8x128xf32>
    %c0_2 = arith.constant 0 : index
    %c0_3 = arith.constant 0 : index
    %c0_4 = arith.constant 0 : index
    %c0_5 = arith.constant 0 : index
    %12 = vector.load %arg2[%c0_2, %c0_3, %c0_4, %c0_5] : memref<1x3x8x128xf32, #tpu.memory_space<vmem>>, vector<1x1x8x128xf32>
    %13 = vector.shape_cast %12 : vector<1x1x8x128xf32> to vector<8x128xf32>
    %14 = arith.negf %13 : vector<8x128xf32>
    %15 = math.exp %14 : vector<8x128xf32>
    %cst = arith.constant 1.000000e+00 : f32
    %16 = vector.broadcast %cst : f32 to vector<8x128xf32>
    %17 = arith.addf %16, %15 : vector<8x128xf32>
    %18 = arith.divf %16, %17 : vector<8x128xf32>
    %cst_6 = arith.constant 0.000000e+00 : f32
    %19 = vector.shape_cast %10 : vector<8x1xi1> to vector<8x1xi1>
    %20 = vector.broadcast %19 : vector<8x1xi1> to vector<8x128xi1>
    %21 = vector.broadcast %cst_6 : f32 to vector<8x128xf32>
    %22 = arith.select %20, %13, %21 : vector<8x128xi1>, vector<8x128xf32>
    %23 = math.exp %22 : vector<8x128xf32>
    %24 = vector.shape_cast %10 : vector<8x1xi1> to vector<8x1xi1>
    %25 = vector.broadcast %24 : vector<8x1xi1> to vector<8x128xi1>
    %26 = arith.select %25, %23, %13 : vector<8x128xi1>, vector<8x128xf32>
    %27 = vector.shape_cast %5 : vector<8x1xi1> to vector<8x1xi1>
    %28 = vector.broadcast %27 : vector<8x1xi1> to vector<8x128xi1>
    %29 = arith.select %28, %18, %26 : vector<8x128xi1>, vector<8x128xf32>
    %30 = arith.addf %29, %11 : vector<8x128xf32>
    %c0_7 = arith.constant 0 : index
    %c0_8 = arith.constant 0 : index
    %c0_9 = arith.constant 0 : index
    %31 = vector.load %arg4[%c0_7, %c0_8, %c0_9] : memref<3x8x1xf32, #tpu.memory_space<vmem>>, vector<1x8x1xf32>
    %32 = vector.shape_cast %31 : vector<1x8x1xf32> to vector<8x1xf32>
    %33 = vector.broadcast %32 : vector<8x1xf32> to vector<8x128xf32>
    %34 = arith.mulf %30, %33 : vector<8x128xf32>
    %c0_10 = arith.constant 0 : index
    %c0_11 = arith.constant 0 : index
    %c0_12 = arith.constant 0 : index
    %c0_13 = arith.constant 0 : index
    %35 = vector.load %arg5[%c0_10, %c0_11, %c0_12, %c0_13] : memref<1x3x8x128xf32, #tpu.memory_space<vmem>>, vector<1x1x8x128xf32>
    %36 = vector.shape_cast %35 : vector<1x1x8x128xf32> to vector<8x128xf32>
    %37 = vector.shape_cast %34 : vector<8x128xf32> to vector<1x1x8x128xf32>
    tpu.vector_store %arg5[%c0_10, %c0_11, %c0_12, %c0_13], %37 {strides = array<i32>} : memref<1x3x8x128xf32, #tpu.memory_space<vmem>>, vector<1x1x8x128xf32>,
    %c0_14 = arith.constant 0 : index
    %c1 = arith.constant 1 : index
    %c0_15 = arith.constant 0 : index
    %c0_16 = arith.constant 0 : index
    %38 = vector.load %arg2[%c0_14, %c1, %c0_15, %c0_16] : memref<1x3x8x128xf32, #tpu.memory_space<vmem>>, vector<1x1x8x128xf32>
    %39 = vector.shape_cast %38 : vector<1x1x8x128xf32> to vector<8x128xf32>
    %40 = arith.negf %39 : vector<8x128xf32>
    %41 = math.exp %40 : vector<8x128xf32>
    %cst_17 = arith.constant 1.000000e+00 : f32
    %42 = vector.broadcast %cst_17 : f32 to vector<8x128xf32>
    %43 = arith.addf %42, %41 : vector<8x128xf32>
    %44 = arith.divf %42, %43 : vector<8x128xf32>
    %cst_18 = arith.constant 0.000000e+00 : f32
    %45 = vector.shape_cast %10 : vector<8x1xi1> to vector<8x1xi1>
    %46 = vector.broadcast %45 : vector<8x1xi1> to vector<8x128xi1>
    %47 = vector.broadcast %cst_18 : f32 to vector<8x128xf32>
    %48 = arith.select %46, %39, %47 : vector<8x128xi1>, vector<8x128xf32>
    %49 = math.exp %48 : vector<8x128xf32>
    %50 = vector.shape_cast %10 : vector<8x1xi1> to vector<8x1xi1>
    %51 = vector.broadcast %50 : vector<8x1xi1> to vector<8x128xi1>
    %52 = arith.select %51, %49, %39 : vector<8x128xi1>, vector<8x128xf32>
    %53 = vector.shape_cast %5 : vector<8x1xi1> to vector<8x1xi1>
    %54 = vector.broadcast %53 : vector<8x1xi1> to vector<8x128xi1>
    %55 = arith.select %54, %44, %52 : vector<8x128xi1>, vector<8x128xf32>
    %56 = arith.addf %55, %11 : vector<8x128xf32>
    %c1_19 = arith.constant 1 : index
    %c0_20 = arith.constant 0 : index
    %c0_21 = arith.constant 0 : index
    %57 = vector.load %arg4[%c1_19, %c0_20, %c0_21] : memref<3x8x1xf32, #tpu.memory_space<vmem>>, vector<1x8x1xf32>
    %58 = vector.shape_cast %57 : vector<1x8x1xf32> to vector<8x1xf32>
    %59 = vector.broadcast %58 : vector<8x1xf32> to vector<8x128xf32>
    %60 = arith.mulf %56, %59 : vector<8x128xf32>
    %c0_22 = arith.constant 0 : index
    %c1_23 = arith.constant 1 : index
    %c0_24 = arith.constant 0 : index
    %c0_25 = arith.constant 0 : index
    %61 = vector.load %arg5[%c0_22, %c1_23, %c0_24, %c0_25] : memref<1x3x8x128xf32, #tpu.memory_space<vmem>>, vector<1x1x8x128xf32>
    %62 = vector.shape_cast %61 : vector<1x1x8x128xf32> to vector<8x128xf32>
    %63 = vector.shape_cast %60 : vector<8x128xf32> to vector<1x1x8x128xf32>
    tpu.vector_store %arg5[%c0_22, %c1_23, %c0_24, %c0_25], %63 {strides = array<i32>} : memref<1x3x8x128xf32, #tpu.memory_space<vmem>>, vector<1x1x8x128xf32>,
    %c0_26 = arith.constant 0 : index
    %c2 = arith.constant 2 : index
    %c0_27 = arith.constant 0 : index
    %c0_28 = arith.constant 0 : index
    %64 = vector.load %arg2[%c0_26, %c2, %c0_27, %c0_28] : memref<1x3x8x128xf32, #tpu.memory_space<vmem>>, vector<1x1x8x128xf32>
    %65 = vector.shape_cast %64 : vector<1x1x8x128xf32> to vector<8x128xf32>
    %66 = arith.negf %65 : vector<8x128xf32>
    %67 = math.exp %66 : vector<8x128xf32>
    %cst_29 = arith.constant 1.000000e+00 : f32
    %68 = vector.broadcast %cst_29 : f32 to vector<8x128xf32>
    %69 = arith.addf %68, %67 : vector<8x128xf32>
    %70 = arith.divf %68, %69 : vector<8x128xf32>
    %cst_30 = arith.constant 0.000000e+00 : f32
    %71 = vector.shape_cast %10 : vector<8x1xi1> to vector<8x1xi1>
    %72 = vector.broadcast %71 : vector<8x1xi1> to vector<8x128xi1>
    %73 = vector.broadcast %cst_30 : f32 to vector<8x128xf32>
    %74 = arith.select %72, %65, %73 : vector<8x128xi1>, vector<8x128xf32>
    %75 = math.exp %74 : vector<8x128xf32>
    %76 = vector.shape_cast %10 : vector<8x1xi1> to vector<8x1xi1>
    %77 = vector.broadcast %76 : vector<8x1xi1> to vector<8x128xi1>
    %78 = arith.select %77, %75, %65 : vector<8x128xi1>, vector<8x128xf32>
    %79 = vector.shape_cast %5 : vector<8x1xi1> to vector<8x1xi1>
    %80 = vector.broadcast %79 : vector<8x1xi1> to vector<8x128xi1>
    %81 = arith.select %80, %70, %78 : vector<8x128xi1>, vector<8x128xf32>
    %82 = arith.addf %81, %11 : vector<8x128xf32>
    %c2_31 = arith.constant 2 : index
    %c0_32 = arith.constant 0 : index
    %c0_33 = arith.constant 0 : index
    %83 = vector.load %arg4[%c2_31, %c0_32, %c0_33] : memref<3x8x1xf32, #tpu.memory_space<vmem>>, vector<1x8x1xf32>
    %84 = vector.shape_cast %83 : vector<1x8x1xf32> to vector<8x1xf32>
    %85 = vector.broadcast %84 : vector<8x1xf32> to vector<8x128xf32>
    %86 = arith.mulf %82, %85 : vector<8x128xf32>
    %c0_34 = arith.constant 0 : index
    %c2_35 = arith.constant 2 : index
    %c0_36 = arith.constant 0 : index
    %c0_37 = arith.constant 0 : index
    %87 = vector.load %arg5[%c0_34, %c2_35, %c0_36, %c0_37] : memref<1x3x8x128xf32, #tpu.memory_space<vmem>>, vector<1x1x8x128xf32>
    %88 = vector.shape_cast %87 : vector<1x1x8x128xf32> to vector<8x128xf32>
    %89 = vector.shape_cast %86 : vector<8x128xf32> to vector<1x1x8x128xf32>
    tpu.vector_store %arg5[%c0_34, %c2_35, %c0_36, %c0_37], %89 {strides = array<i32>} : memref<1x3x8x128xf32, #tpu.memory_space<vmem>>, vector<1x1x8x128xf32>,
    return
  }
  func.func @transform_0(%arg0: i32, %arg1: i32) -> (i32, i32, i32, i32) {
    %c0_i32 = arith.constant 0 : i32
    %c0_i32_0 = arith.constant 0 : i32
    %c0_i32_1 = arith.constant 0 : i32
    return %arg0, %c0_i32, %c0_i32_0, %arg1 : i32, i32, i32, i32
  }
  func.func @transform_1(%arg0: i32, %arg1: i32) -> (i32, i32) {
    %c0_i32 = arith.constant 0 : i32
    %c0_i32_0 = arith.constant 0 : i32
    return %c0_i32, %arg1 : i32, i32
  }
  func.func @transform_2(%arg0: i32, %arg1: i32) -> (i32, i32, i32) {
    %c0_i32 = arith.constant 0 : i32
    %c0_i32_0 = arith.constant 0 : i32
    %c0_i32_1 = arith.constant 0 : i32
    %c0_i32_2 = arith.constant 0 : i32
    return %c0_i32, %c0_i32_0, %c0_i32_1 : i32, i32, i32
  }
  func.func @transform_3(%arg0: i32, %arg1: i32) -> (i32, i32, i32, i32) {
    %c0_i32 = arith.constant 0 : i32
    %c0_i32_0 = arith.constant 0 : i32
    %c0_i32_1 = arith.constant 0 : i32
    return %arg0, %c0_i32, %c0_i32_0, %arg1 : i32, i32, i32, i32
  }
}

</mosaic_0001>

<llo_original>
// kernel: tpu_custom_call.1
$region0: #{tpu_custom_call.1}
  #allocation0 [shape = 'u32[]', space=smem, size = 0x4, offset = 0x4, fixed_abs, tag = 'smem constant byte address 0x4 - core index']
  #allocation1 [shape = 'u32[72,128]{1,0:T(1,128)}', space=vmem, size = 0x9000, scoped, tag = 'internal scratch']
  %s0 = inlined_call_operand.hbm [shape: f32[2,3,8,256], index: 0, kind: input, shape index: {}]
  %s1 = inlined_call_operand.vmem [shape: f32[8,256], index: 1, kind: input, shape index: {}]
  %s2 = inlined_call_operand.vmem [shape: f32[3,8,1], index: 2, kind: input, shape index: {}]
  %s3 = inlined_call_operand.hbm [shape: f32[2,3,8,256], index: 3, kind: output, shape index: {}]
  %s4 = sld [smem:[#allocation0]]
  $region49: #{tpu_custom_call.1} parent=0
    _
  %s6 = ssub.s32 1, %s4
  %s7 = scalar_select 0, %s6, %s4
  $region1: #{tpu_custom_call.1} parent=0
    #allocation2 [shape = 'u8[24576]{0}', space=vmem, size = 0x6000, scoped, tag = 'input window, operand 0']
    #allocation3 [shape = 's32[2]{0}', space=sflag, size = 0x8, scoped, tag = 'scoped memory for tpu_custom_call.1']
    #allocation4 [shape = 's32[2]{0}', space=sflag, size = 0x8, scoped, tag = 'scoped memory for tpu_custom_call.1']
    #allocation5 [shape = 'u8[24576]{0}', space=vmem, size = 0x6000, scoped, tag = 'output window, operand 0']
    %8 = vsyncpa [#allocation3], 0
    %s9 = scalar_lea.sflag [#allocation3], 1
    %10 = vsyncpa %s9, 0
    %11 = vsyncpa [#allocation4], 0
    %s12 = scalar_lea.sflag [#allocation4], 1
    %13 = vsyncpa %s12, 0
    loop: start=0, step=1, limit=6
    $region2: #{tpu_custom_call.1} parent=1 // loop_pre_header
      _
    $region3: #{tpu_custom_call.1} parent=1 // loop_header
      %s15 = sphi 0, %s19
      %p16 = scmp.ge.s32.totalorder %s15, 6
      %s22 = sphi 0, %s34
      %s23 = sphi 0, %s30
      %s24 = sphi 0, %s22
      %s25 = sphi 0, %s23
      %s26 = sphi 0, %s24
      %s27 = sphi 0, %s25
      %s39 = sphi 0, %s41
      %s42 = sphi 0, %s39
      %s43 = sphi 0, %s42
      %s59 = sphi 0, %s43
      %s65 = sphi 0, %s67
      %s68 = sphi 0, %s65
      %s69 = sphi 0, %s68
      %s85 = sphi 0, %s69
      %s89 = sphi 0, %s89
      %s91 = sphi 0, %s89
      %s92 = sphi 0, %s91
      %s106 = sphi 0, %s92
      %s114 = sphi 0, %s116
      %s117 = sphi 0, %s114
      %s118 = sphi 0, %s117
      %s134 = sphi 0, %s118
    $region4: #{tpu_custom_call.1} parent=1 // loop_header_branch
      %18 = sbr.rel (%p16) target = $region8
    $region5: #{tpu_custom_call.1} parent=1 // loop_body
      %s20 = ssub.s32 %s15, 1
      %s21 = ssub.s32 %s15, 2
      %s28 = sadd.s32 1, %s23
      %p29 = scmp.ge.s32.totalorder %s28, 2
      %s30 = scalar_select %p29, 0, %s28
      %s31 = sadd.s32 1, %s22
      %s32 = scalar_select %p29, %s31, %s22
      %p33 = scmp.ge.s32.totalorder %s32, 2
      %s34 = scalar_select %p33, 0, %s32
      %s35 = ssub.s32 %s22, %s34
      %s36 = ssub.s32 %s23, %s30
      %s37 = sor.u32 %s35, %s36
      %p38 = scmp.eq.s32.totalorder %s37, 0
      %s40 = sadd.s32 %s39, 1
      %s41 = scalar_select %p38, %s39, %s40
      %p44 = pneg %p38
      %p45 = scmp.eq.s32.totalorder %s15, 3
      %p46 = por %p44, %p45
      %p47 = scmp.ne.s32.totalorder %s39, %s42
      %p48 = scmp.eq.s32.totalorder %s15, 0
      %p49 = por %p47, %p48
      %p50 = scmp.ne.s32.totalorder %s39, %s42
      %p51 = scmp.eq.s32.totalorder %s20, 3
      %p52 = por %p50, %p51
      %p53 = scmp.ne.s32.totalorder %s42, %s43
      %p54 = scmp.eq.s32.totalorder %s20, 0
      %p55 = por %p53, %p54
      %p56 = scmp.ne.s32.totalorder %s42, %s43
      %p57 = scmp.eq.s32.totalorder %s21, 3
      %p58 = por %p56, %p57
      %p60 = scmp.ne.s32.totalorder %s43, %s59
      %p61 = scmp.eq.s32.totalorder %s21, 0
      %p62 = por %p60, %p61
      %s63 = ssub.s32 %s23, %s30
      %p64 = scmp.eq.s32.totalorder %s63, 0
      %s66 = sadd.s32 %s65, 1
      %s67 = scalar_select %p64, %s65, %s66
      %p70 = pneg %p64
      %p71 = scmp.eq.s32.totalorder %s15, 3
      %p72 = por %p70, %p71
      %p73 = scmp.ne.s32.totalorder %s65, %s68
      %p74 = scmp.eq.s32.totalorder %s15, 0
      %p75 = por %p73, %p74
      %p76 = scmp.ne.s32.totalorder %s65, %s68
      %p77 = scmp.eq.s32.totalorder %s20, 3
      %p78 = por %p76, %p77
      %p79 = scmp.ne.s32.totalorder %s68, %s69
      %p80 = scmp.eq.s32.totalorder %s20, 0
      %p81 = por %p79, %p80
      %p82 = scmp.ne.s32.totalorder %s68, %s69
      %p83 = scmp.eq.s32.totalorder %s21, 3
      %p84 = por %p82, %p83
      %p86 = scmp.ne.s32.totalorder %s69, %s85
      %p87 = scmp.eq.s32.totalorder %s21, 0
      %p88 = por %p86, %p87
      %s90 = sadd.s32 %s89, 1
      %p93 = scmp.eq.s32.totalorder %s15, 3
      %p94 = scmp.ne.s32.totalorder %s89, %s91
      %p95 = scmp.eq.s32.totalorder %s15, 0
      %p96 = por %p94, %p95
      %p97 = scmp.ne.s32.totalorder %s89, %s91
      %p98 = scmp.eq.s32.totalorder %s20, 3
      %p99 = por %p97, %p98
      %p100 = scmp.ne.s32.totalorder %s91, %s92
      %p101 = scmp.eq.s32.totalorder %s20, 0
      %p102 = por %p100, %p101
      %p103 = scmp.ne.s32.totalorder %s91, %s92
      %p104 = scmp.eq.s32.totalorder %s21, 3
      %p105 = por %p103, %p104
      %p107 = scmp.ne.s32.totalorder %s92, %s106
      %p108 = scmp.eq.s32.totalorder %s21, 0
      %p109 = por %p107, %p108
      %s110 = ssub.s32 %s22, %s34
      %s111 = ssub.s32 %s23, %s30
      %s112 = sor.u32 %s110, %s111
      %p113 = scmp.eq.s32.totalorder %s112, 0
      %s115 = sadd.s32 %s114, 1
      %s116 = scalar_select %p113, %s114, %s115
      %p119 = pneg %p113
      %p120 = scmp.eq.s32.totalorder %s15, 3
      %p121 = por %p119, %p120
      %p122 = scmp.ne.s32.totalorder %s114, %s117
      %p123 = scmp.eq.s32.totalorder %s15, 0
      %p124 = por %p122, %p123
      %p125 = scmp.ne.s32.totalorder %s114, %s117
      %p126 = scmp.eq.s32.totalorder %s20, 3
      %p127 = por %p125, %p126
      %p128 = scmp.ne.s32.totalorder %s117, %s118
      %p129 = scmp.eq.s32.totalorder %s20, 0
      %p130 = por %p128, %p129
      %p131 = scmp.ne.s32.totalorder %s117, %s118
      %p132 = scmp.eq.s32.totalorder %s21, 3
      %p133 = por %p131, %p132
      %p135 = scmp.ne.s32.totalorder %s118, %s134
      %p136 = scmp.eq.s32.totalorder %s21, 0
      %p137 = por %p135, %p136
      %p138 = scmp.le.s32.totalorder 1, %s15
      %p139 = scmp.lt.s32.totalorder %s15, 5
      %p140 = pnand %p138, %p139
      %p141 = pneg %p140
      // Predicated region
      $region9: #{tpu_custom_call.1} parent=5 // pred_check
        _
      $region10: #{tpu_custom_call.1} parent=5 // pred_check_branch
        %143 = sbr.rel (%p140) target = $region12
      $region11: #{tpu_custom_call.1} parent=5 // pred_region
        %s144 = ssub.s32 %s15, 1
        // Predicated region
        $region13: #{tpu_custom_call.1} parent=11 // pred_check
          %p145 = pneg %p102
        $region14: #{tpu_custom_call.1} parent=11 // pred_check_branch
          %147 = sbr.rel (%p145) target = $region16
        $region15: #{tpu_custom_call.1} parent=11 // pred_region
          _
        $region16: #{tpu_custom_call.1} parent=11 // pred_fallthru
          _
      $region12: #{tpu_custom_call.1} parent=5 // pred_fallthru
        _
      %p148 = scmp.lt.s32.totalorder %s15, 4
      // Predicated region
      $region17: #{tpu_custom_call.1} parent=5 // pred_check
        %p149 = pneg %p148
      $region18: #{tpu_custom_call.1} parent=5 // pred_check_branch
        %151 = sbr.rel (%p149) target = $region20
      $region19: #{tpu_custom_call.1} parent=5 // pred_region
        // Predicated region
        $region21: #{tpu_custom_call.1} parent=19 // pred_check
          %p152 = pneg %p49
        $region22: #{tpu_custom_call.1} parent=19 // pred_check_branch
          %154 = sbr.rel (%p152) target = $region24
        $region23: #{tpu_custom_call.1} parent=19 // pred_region
          %s155 = sand.u32 %s39, 1
          %s156 = scalar_lea.sflag [#allocation3], %s155
          %s157 = sand.u32 %s39, 1
          %s158 = smul.addr %s157, 24
          %s159 = scalar_lea.vmem [#allocation2], %s158
          %161 = vsyncadd %s156, 0
          %s162 = smul.addr %s22, 6
          %s163 = sadd.s32 %s23, %s162
          %s164 = smul.addr %s163, 8
          %s165 = scalar_lea.hbm %s0, %s164
          %s166 = sshll.u32 %s165, 4
          %s167 = int_to_ptr.hbm [resolvable:$true] %s166
          %s168 = sshll.u32 %s159, 4
          %s169 = int_to_ptr.vmem [resolvable:$true] %s168
          %174 = dma.hbm_to_vmem [thread:$0]  %s167, 384, %s169, %s156, 256, 128, 8
        $region24: #{tpu_custom_call.1} parent=19 // pred_fallthru
          _
        // Predicated region
        $region25: #{tpu_custom_call.1} parent=19 // pred_check
          %p175 = pneg %p75
        $region26: #{tpu_custom_call.1} parent=19 // pred_check_branch
          %177 = sbr.rel (%p175) target = $region28
        $region27: #{tpu_custom_call.1} parent=19 // pred_region
          %p178 = scmp.lt.s32.totalorder %s23, 1
          %s179 = scalar_select %p178, %s23, 1
          %s180 = smul.addr %s179, 8
          %s181 = scalar_lea.vmem %s1, %s180
        $region28: #{tpu_custom_call.1} parent=19 // pred_fallthru
          _
      $region20: #{tpu_custom_call.1} parent=5 // pred_fallthru
        _
      %p182 = scmp.le.s32.totalorder 1, %s15
      %p183 = scmp.lt.s32.totalorder %s15, 5
      %p184 = pnand %p182, %p183
      %p185 = pneg %p184
      // Predicated region
      $region29: #{tpu_custom_call.1} parent=5 // pred_check
        _
      $region30: #{tpu_custom_call.1} parent=5 // pred_check_branch
        %187 = sbr.rel (%p184) target = $region32
      $region31: #{tpu_custom_call.1} parent=5 // pred_region
        %s188 = ssub.s32 %s15, 1
        %s189 = sand.u32 %s42, 1
        %s190 = scalar_lea.sflag [#allocation3], %s189
        %s191 = sand.u32 %s42, 1
        %s192 = smul.addr %s191, 24
        %s193 = scalar_lea.vmem [#allocation2], %s192
        // Predicated region
        $region33: #{tpu_custom_call.1} parent=31 // pred_check
          %p194 = pneg %p55
        $region34: #{tpu_custom_call.1} parent=31 // pred_check_branch
          %196 = sbr.rel (%p194) target = $region36
        $region35: #{tpu_custom_call.1} parent=31 // pred_region
          %198 = dma.done %s190, 384
        $region36: #{tpu_custom_call.1} parent=31 // pred_fallthru
          _
        %s199 = sand.u32 %s42, 1
        %s200 = scalar_lea.sflag [#allocation3], %s199
        %s201 = sand.u32 %s42, 1
        %s202 = smul.addr %s201, 24
        %s203 = scalar_lea.vmem [#allocation2], %s202
        %p204 = pneg %p55
        %p205 = pneg %p52
        %p206 = scmp.lt.s32.totalorder %s25, 1
        %s207 = scalar_select %p206, %s25, 1
        %s208 = smul.addr %s207, 8
        %s209 = scalar_lea.vmem %s1, %s208
        %p210 = pneg %p81
        %p211 = pneg %p78
        %p212 = pneg %p102
        %p213 = pneg %p99
        %p214 = pneg %p130
        %p215 = pneg %p127
        %s216 = sand.u32 %s117, 1
        %s217 = scalar_lea.sflag [#allocation4], %s216
        %s218 = sand.u32 %s117, 1
        %s219 = smul.addr %s218, 24
        %s220 = scalar_lea.vmem [#allocation5], %s219
        %p221 = scmp.lt.s32.totalorder %s25, 1
        %s222 = scalar_select %p221, %s25, 1
        %s223 = smul.addr %s222, 8
        %s224 = scalar_lea.vmem %s1, %s223
        %v225 = vlaneseq
        %v226 = vshrl.u32 %v225, 7
        %vm227 = vcmp.lt.s32.totalorder %v226, 2
        %vm228 = vcmp.eq.s32.totalorder %v226, 4
        %vm229 = vmor %vm227, %vm228
        %vm230 = vcmp.eq.s32.totalorder %v226, 2
        %vm231 = vcmp.eq.s32.totalorder %v226, 3
        %vm232 = vmor %vm230, %vm231
        %v233 = vld [vmem:[%s224] sm:$0xff]
        %v234 = vld [vmem:[%s193] sm:$0xff]
        %v235 = vxor.u32 %v234, 2147483648
        %v236 = vmul.f32 %v235, 1.442695
        %v237 = vpow.pop %v236
        %v238 = vadd.f32 %v237, 1.0
        %v239 = vrcp.pop %v238
        %v240 = vmul.f32 %v238, %v239
        %v241 = vsub.f32 1.0, %v240
        %v242 = vmul.f32 %v239, %v241
        %v243 = vadd.f32 %v239, %v242
        %vm244 = vweird.f32 %v238
        %vm245 = vweird.f32 %v239
        %vm246 = vmor %vm244, %vm245
        %v247 = vsel %vm246, %v239, %v243
        %v248 = vand.u32 2147483647, %v238
        %vm249 = vcmp.eq.f32.partialorder %v248, 8.507059e+37
        %v250 = vand.u32 %v238, 2147483648
        %v251 = vor.u32 1.1754944e-38, %v250
        %v252 = vsel %vm249, %v251, %v247
        %v253 = vmul.f32 1.0, %v252
        %v254 = vsel %vm232, 1, 0
        %vm255 = vcmp.eq.s32.totalorder %v254, 1
        %v256 = vsel %vm255, %v234, 0.0
        %v257 = vmul.f32 %v256, 1.442695
        %v258 = vpow.pop %v257
        %v259 = vsel %vm255, %v258, %v234
        %v260 = vsel %vm229, 1, 0
        %vm261 = vcmp.eq.s32.totalorder %v260, 1
        %v262 = vsel %vm261, %v253, %v259
        %v263 = vadd.f32 %v262, %v233
        %v264 = vld [vmem:[%s2] sm:$0xff]
        %266 = vset.pattern.permute.xlu0 0
        %267 = vperm.xlu0 %266, %v264
        %v268 = vpop.permute.xlu0 %267
        %v270 = vmul.f32 %v263, %v268
        %271 = vst [vmem:[%s220] sm:$0xff] %v270
        %s272 = scalar_lea.vmem %s193, 8 [#allocation2]
        %v273 = vld [vmem:[%s272] sm:$0xff]
        %v274 = vxor.u32 %v273, 2147483648
        %v275 = vmul.f32 %v274, 1.442695
        %v276 = vpow.pop %v275
        %v277 = vadd.f32 %v276, 1.0
        %v278 = vrcp.pop %v277
        %v279 = vmul.f32 %v277, %v278
        %v280 = vsub.f32 1.0, %v279
        %v281 = vmul.f32 %v278, %v280
        %v282 = vadd.f32 %v278, %v281
        %vm283 = vweird.f32 %v277
        %vm284 = vweird.f32 %v278
        %vm285 = vmor %vm283, %vm284
        %v286 = vsel %vm285, %v278, %v282
        %v287 = vand.u32 2147483647, %v277
        %vm288 = vcmp.eq.f32.partialorder %v287, 8.507059e+37
        %v289 = vand.u32 %v277, 2147483648
        %v290 = vor.u32 1.1754944e-38, %v289
        %v291 = vsel %vm288, %v290, %v286
        %v292 = vmul.f32 1.0, %v291
        %v293 = vsel %vm255, %v273, 0.0
        %v294 = vmul.f32 %v293, 1.442695
        %v295 = vpow.pop %v294
        %v296 = vsel %vm255, %v295, %v273
        %v297 = vsel %vm261, %v292, %v296
        %v298 = vadd.f32 %v297, %v233
        %s299 = scalar_lea.vmem %s2, 8
        %v300 = vld [vmem:[%s299] sm:$0xff]
        %302 = vset.pattern.permute.xlu0 0
        %303 = vperm.xlu0 %302, %v300
        %v304 = vpop.permute.xlu0 %303
        %v306 = vmul.f32 %v298, %v304
        %s307 = scalar_lea.vmem %s220, 8 [#allocation5]
        %308 = vst [vmem:[%s307] sm:$0xff] %v306
        %s309 = scalar_lea.vmem %s193, 16 [#allocation2]
        %v310 = vld [vmem:[%s309] sm:$0xff]
        %v311 = vxor.u32 %v310, 2147483648
        %v312 = vmul.f32 %v311, 1.442695
        %v313 = vpow.pop %v312
        %v314 = vadd.f32 %v313, 1.0
        %v315 = vrcp.pop %v314
        %v316 = vmul.f32 %v314, %v315
        %v317 = vsub.f32 1.0, %v316
        %v318 = vmul.f32 %v315, %v317
        %v319 = vadd.f32 %v315, %v318
        %vm320 = vweird.f32 %v314
        %vm321 = vweird.f32 %v315
        %vm322 = vmor %vm320, %vm321
        %v323 = vsel %vm322, %v315, %v319
        %v324 = vand.u32 2147483647, %v314
        %vm325 = vcmp.eq.f32.partialorder %v324, 8.507059e+37
        %v326 = vand.u32 %v314, 2147483648
        %v327 = vor.u32 1.1754944e-38, %v326
        %v328 = vsel %vm325, %v327, %v323
        %v329 = vmul.f32 1.0, %v328
        %v330 = vsel %vm255, %v310, 0.0
        %v331 = vmul.f32 %v330, 1.442695
        %v332 = vpow.pop %v331
        %v333 = vsel %vm255, %v332, %v310
        %v334 = vsel %vm261, %v329, %v333
        %v335 = vadd.f32 %v334, %v233
        %s336 = scalar_lea.vmem %s2, 16
        %v337 = vld [vmem:[%s336] sm:$0xff]
        %339 = vset.pattern.permute.xlu0 0
        %340 = vperm.xlu0 %339, %v337
        %v341 = vpop.permute.xlu0 %340
        %v343 = vmul.f32 %v335, %v341
        %s344 = scalar_lea.vmem %s220, 16 [#allocation5]
        %345 = vst [vmem:[%s344] sm:$0xff] %v343
        %s346 = sand.u32 %s117, 1
        %s347 = scalar_lea.sflag [#allocation4], %s346
        %s348 = sand.u32 %s117, 1
        %s349 = smul.addr %s348, 24
        %s350 = scalar_lea.vmem [#allocation5], %s349
        // Predicated region
        $region37: #{tpu_custom_call.1} parent=31 // pred_check
          %p351 = pneg %p127
        $region38: #{tpu_custom_call.1} parent=31 // pred_check_branch
          %353 = sbr.rel (%p351) target = $region40
        $region39: #{tpu_custom_call.1} parent=31 // pred_region
          %355 = vsyncadd %s347, 0
          %s356 = smul.addr %s24, 6
          %s357 = sadd.s32 %s25, %s356
          %s358 = smul.addr %s357, 8
          %s359 = scalar_lea.hbm %s3, %s358
          %s360 = sshll.u32 %s350, 4
          %s361 = int_to_ptr.vmem [resolvable:$true] %s360
          %s362 = sshll.u32 %s359, 4
          %s363 = int_to_ptr.hbm [resolvable:$true] %s362
          %368 = dma.vmem_to_hbm [thread:$0]  %s361, 384, %s363, %s347, 128, 256, 8
        $region40: #{tpu_custom_call.1} parent=31 // pred_fallthru
          _
      $region32: #{tpu_custom_call.1} parent=5 // pred_fallthru
        _
      %p369 = scmp.le.s32.totalorder 2, %s15
      // Predicated region
      $region41: #{tpu_custom_call.1} parent=5 // pred_check
        %p370 = pneg %p369
      $region42: #{tpu_custom_call.1} parent=5 // pred_check_branch
        %372 = sbr.rel (%p370) target = $region44
      $region43: #{tpu_custom_call.1} parent=5 // pred_region
        %s373 = ssub.s32 %s15, 2
        // Predicated region
        $region45: #{tpu_custom_call.1} parent=43 // pred_check
          %p374 = pneg %p133
        $region46: #{tpu_custom_call.1} parent=43 // pred_check_branch
          %376 = sbr.rel (%p374) target = $region48
        $region47: #{tpu_custom_call.1} parent=43 // pred_region
          %s377 = sand.u32 %s118, 1
          %s378 = scalar_lea.sflag [#allocation4], %s377
          %s379 = sand.u32 %s118, 1
          %s380 = smul.addr %s379, 24
          %s381 = scalar_lea.vmem [#allocation5], %s380
          %383 = dma.done %s378, 384
        $region48: #{tpu_custom_call.1} parent=43 // pred_fallthru
          _
      $region44: #{tpu_custom_call.1} parent=5 // pred_fallthru
        _
    $region6: #{tpu_custom_call.1} parent=1 // loop_footer
      %s19 = sadd.s32 1, %s15
    $region7: #{tpu_custom_call.1} parent=1 // loop_footer_branch
      %14 = sbr.rel target = $region3
    $region8: #{tpu_custom_call.1} parent=1 // loop_exit
      _
    %384 = vsyncpa [#allocation3], 1
    %s385 = scalar_lea.sflag [#allocation3], 1
    %386 = vsyncpa %s385, 1
    %387 = vsyncpa [#allocation4], 1
    %s388 = scalar_lea.sflag [#allocation4], 1
    %389 = vsyncpa %s388, 1

</llo_original>
